<compile_context>
chip_gen: v7x
topology: tpu7x:2x2x1
jax: 0.10.0
libtpu: 0.0.40
codegen_flags: <defaults>
</compile_context>

<pallas_src>
import functools

import jax
import jax.numpy as jnp
from jax.experimental import pallas as pl
from jax.experimental.pallas import tpu as pltpu


def _round_up(x, m):
    return (x + m - 1) // m * m


def _cdiv(a, b):
    return -(-a // b)


# ---------------------------------------------------------------------------
# Generation-aware VMEM budget, queried once at import.
#   v5e/v6e (128 MiB physical) -> ~110 MiB limit ; v7x (64 MiB) -> ~54 MiB.
# ---------------------------------------------------------------------------
def _query_vmem_limit():
    cap = 64 * 1024 * 1024  # conservative default (v7x-sized)
    try:
        info = pltpu.get_tpu_info()
        c = getattr(info, "vmem_capacity_bytes", None)
        if c:
            cap = int(c)
    except Exception:
        pass
    limit = min(int(cap * 0.85), cap - 8 * 1024 * 1024, 112 * 1024 * 1024)
    return max(limit, 32 * 1024 * 1024)


_VMEM_LIMIT = _query_vmem_limit()
_TILE_BUDGET = int(_VMEM_LIMIT * 0.9)  # headroom for Mosaic internal scratch


# ---------------------------------------------------------------------------
# Kernel
# ---------------------------------------------------------------------------
def _ffn_body(x_ref, w1_ref, b1_ref, w2_ref, b2_ref, o_ref, acc_ref):
    # x_ref : (tm, dm_p)    w1_ref : (dm_p, tf)   b1_ref : (1, tf)
    # w2_ref: (tf, dm_p)    b2_ref : (1, dm_p)    o_ref  : (tm, dm_p)
    # acc_ref: f32 scratch (None when the output itself is f32).
    j = pl.program_id(1)  # d_ff tile index (reduction axis, last in grid)
    acc = o_ref if acc_ref is None else acc_ref

    @pl.when(j == 0)
    def _():
        # Initialise the accumulator with the second bias (added exactly once).
        acc[...] = jnp.broadcast_to(b2_ref[...].astype(acc.dtype), acc.shape)

    # GEMM 1 tile + bias + ReLU (f32 accumulation on the MXU).
    h = jnp.dot(x_ref[...], w1_ref[...], preferred_element_type=jnp.float32)
    h = jnp.maximum(h + b1_ref[...].astype(jnp.float32), 0.0)
    # Dropout: identity in eval mode.
    # TODO(synk): training-mode dropout (pltpu.prng_random_bits mask + 1/(1-p))
    # not emitted; this kernel matches module.eval().

    # GEMM 2: accumulate this d_ff slice's contribution in f32.
    acc[...] += jnp.dot(h.astype(w2_ref.dtype), w2_ref[...],
                        preferred_element_type=jnp.float32)

    if acc_ref is not None:
        @pl.when(j == pl.num_programs(1) - 1)
        def _():
            o_ref[...] = acc_ref[...].astype(o_ref.dtype)


def _ffn_kernel_acc(x_ref, w1_ref, b1_ref, w2_ref, b2_ref, o_ref, acc_ref):
    _ffn_body(x_ref, w1_ref, b1_ref, w2_ref, b2_ref, o_ref, acc_ref)


def _ffn_kernel_noacc(x_ref, w1_ref, b1_ref, w2_ref, b2_ref, o_ref):
    _ffn_body(x_ref, w1_ref, b1_ref, w2_ref, b2_ref, o_ref, None)


# ---------------------------------------------------------------------------
# Tile selection (all Python ints, resolved at trace time)
# ---------------------------------------------------------------------------
def _choose_tiles(M, dm_p, df_p0, x_isz, w_isz, o_isz, need_acc, sub,
                  tm_req, tf_req):
    budget = _TILE_BUDGET

    def tm_bytes(t):  # x tile (2 bufs) + out tile (2 bufs) + optional f32 acc
        b = 2 * t * dm_p * (x_isz + o_isz)
        if need_acc:
            b += t * dm_p * 4
        return b

    # ---- row tile -----------------------------------------------------------
    if tm_req is not None:
        tm = max(sub, _round_up(min(tm_req, M), sub))
    else:
        tm = min(512, _round_up(M, sub))
        # v7x megacore: keep >= 2 row tiles so both TensorCores get work.
        if M > sub and _round_up(M, sub) // tm < 2:
            tm = _round_up(_cdiv(M, 2), sub)
        tm = max(tm, sub)
        while tm > sub and tm_bytes(tm) > budget // 2:
            tm = max(sub, _round_up(tm // 2, sub))
    n_tm = _cdiv(M, tm)
    tm = _round_up(_cdiv(M, n_tm), sub)      # balance row tiles -> min padding
    Mp = tm * n_tm

    # ---- d_ff tile ----------------------------------------------------------
    rem = max(budget - tm_bytes(tm), 0)
    per_tf = 2 * 2 * dm_p * w_isz + 2 * x_isz  # W1 + W2 double-buffered + b1
    tf_align = 256 if df_p0 % 256 == 0 else 128  # fill 2x256x256 MXU when free
    if tf_req is not None:
        tf_cap = min(df_p0, max(128, _round_up(tf_req, 128)))
    else:
        tf_cap = min(df_p0, max(tf_align, (rem // per_tf) // tf_align * tf_align))
    n_tf = _cdiv(df_p0, tf_cap)
    tf = _round_up(_cdiv(df_p0, n_tf), 128)   # balanced d_ff tiles
    df_p = tf * n_tf
    return tm, Mp, n_tm, tf, df_p, n_tf


def _pad2(a, rows, cols):
    if a.shape == (rows, cols):
        return a
    return jnp.pad(a, ((0, rows - a.shape[0]), (0, cols - a.shape[1])))


# ---------------------------------------------------------------------------
# Public entry point
# ---------------------------------------------------------------------------
@functools.partial(jax.jit, static_argnames=("tm", "tf"))
def positionwise_feed_forward(x, w1, b1, w2, b2, *, tm=None, tf=None):
    """x: (batch, seq, d_model) -> (batch, seq, d_model). Eval-mode dropout.

    w1: (d_model, d_ff), b1: (d_ff,), w2: (d_ff, d_model), b2: (d_model,).
    tm / tf override the automatic row / d_ff tile sizes (None = auto).
    """
    batch, seq, d_model = x.shape
    d_ff = w1.shape[1]
    M = batch * seq

    x_isz = jnp.dtype(x.dtype).itemsize
    w_isz = jnp.dtype(w1.dtype).itemsize
    o_isz = x_isz
    sub = max(8, 32 // x_isz)                        # 8 f32 / 16 bf16 / 32 int8
    need_acc = jnp.dtype(x.dtype) != jnp.dtype(jnp.float32)

    dm_p = _round_up(d_model, 128)                   # lane-dense feature dim
    df_p0 = _round_up(d_ff, 128)

    tm_e, Mp, n_tm, tf_e, df_p, n_tf = _choose_tiles(
        M, dm_p, df_p0, x_isz, w_isz, o_isz, need_acc, sub, tm, tf)

    b1 = b1.reshape(1, d_ff)
    b2 = b2.reshape(1, d_model)

    # Padding is a no-op (skipped) when dims are already aligned — the common
    # transformer case.  For repeated calls with unaligned weights, pre-pad the
    # weights once outside this function to avoid re-copying them per call.
    x2d = _pad2(x.reshape(M, d_model), Mp, dm_p)
    w1p = _pad2(w1, dm_p, df_p)
    b1p = _pad2(b1, 1, df_p)
    w2p = _pad2(w2, df_p, dm_p)
    b2p = _pad2(b2, 1, dm_p)

    grid = (n_tm, n_tf)
    w_stream = 1 if n_tf == 1 else n_tm              # weights resident if n_tf==1
    cost = pl.CostEstimate(
        flops=4 * Mp * dm_p * df_p,
        transcendentals=0,
        bytes_accessed=(Mp * dm_p * (x_isz + o_isz)
                        + w_stream * 2 * dm_p * df_p * w_isz),
    )

    kernel = _ffn_kernel_acc if need_acc else _ffn_kernel_noacc
    scratch = [pltpu.VMEM((tm_e, dm_p), jnp.float32)] if need_acc else []

    out2d = pl.pallas_call(
        kernel,
        out_shape=jax.ShapeDtypeStruct((Mp, dm_p), x.dtype),
        grid_spec=pltpu.PrefetchScalarGridSpec(
            num_scalar_prefetch=0,
            grid=grid,
            in_specs=[
                pl.BlockSpec((tm_e, dm_p), lambda i, j: (i, 0)),   # x row tile
                pl.BlockSpec((dm_p, tf_e), lambda i, j: (0, j)),   # W1 d_ff slice
                pl.BlockSpec((1, tf_e), lambda i, j: (0, j)),      # b1 d_ff slice
                pl.BlockSpec((tf_e, dm_p), lambda i, j: (j, 0)),   # W2 d_ff slice
                pl.BlockSpec((1, dm_p), lambda i, j: (0, 0)),      # b2
            ],
            out_specs=pl.BlockSpec((tm_e, dm_p), lambda i, j: (i, 0)),
            scratch_shapes=scratch,
        ),
        compiler_params=pltpu.CompilerParams(
            dimension_semantics=("parallel", "arbitrary"),
            vmem_limit_bytes=_VMEM_LIMIT,
        ),
        cost_estimate=cost,
    )(x2d, w1p, b1p, w2p, b2p)

    return out2d[:M, :d_model].reshape(batch, seq, d_model)


# ---------------------------------------------------------------------------
# Init / reference / tests
# ---------------------------------------------------------------------------
def init_params(key, d_model, d_ff, dtype=jnp.float32):
    """Deterministic init mimicking nn.Linear (uniform(-1/sqrt(fan_in), ...))."""
    k1, k2, k3, k4 = jax.random.split(key, 4)
    bound1 = 1.0 / (d_model ** 0.5)
    bound2 = 1.0 / (d_ff ** 0.5)
    w1 = jax.random.uniform(k1, (d_model, d_ff), dtype, -bound1, bound1)
    b1 = jax.random.uniform(k2, (1, d_ff), dtype, -bound1, bound1)
    w2 = jax.random.uniform(k3, (d_ff, d_model), dtype, -bound2, bound2)
    b2 = jax.random.uniform(k4, (1, d_model), dtype, -bound2, bound2)
    return w1, b1, w2, b2


def _reference(x, w1, b1, w2, b2, cast_h=None):
    d_model = x.shape[-1]
    h = jnp.maximum(x.reshape(-1, d_model) @ w1 + b1.reshape(1, -1), 0.0)
    if cast_h is not None:
        h = h.astype(cast_h).astype(jnp.float32)
    return (h @ w2 + b2.reshape(1, -1)).reshape(x.shape)


if __name__ == "__main__":
    key = jax.random.PRNGKey(0)
    k1, k2, k3, k4 = jax.random.split(key, 4)

    # --- test 1: module-sized toy shapes, f32, auto tiles -------------------
    batch, seq, d_model, d_ff = 2, 8, 32, 64
    x = jax.random.normal(k1, (batch, seq, d_model), jnp.float32)
    w1, b1, w2, b2 = init_params(k2, d_model, d_ff)
    out = jax.block_until_ready(positionwise_feed_forward(x, w1, b1, w2, b2))
    ref = _reference(x, w1, b1, w2, b2)
    assert out.shape == (batch, seq, d_model)
    assert jnp.allclose(out, ref, atol=1e-5, rtol=1e-5), "f32 single-tile mismatch"

    # --- test 2: multi-tile d_ff reduction, f32 accumulate-into-output -----
    batch2, seq2, dm2, dff2 = 2, 16, 128, 256
    x2 = jax.random.normal(k3, (batch2, seq2, dm2), jnp.float32)
    w1b, b1b, w2b, b2b = init_params(k4, dm2, dff2)
    out2 = jax.block_until_ready(
        positionwise_feed_forward(x2, w1b, b1b, w2b, b2b, tm=16, tf=128))
    ref2 = _reference(x2, w1b, b1b, w2b, b2b)
    assert out2.shape == (batch2, seq2, dm2)
    assert jnp.allclose(out2, ref2, atol=1e-4, rtol=1e-4), "f32 multi-tile mismatch"

    # --- test 3: bf16 activations/weights (f32 MXU accum, f32 scratch path) -
    x3 = x2.astype(jnp.bfloat16)
    w1c, b1c, w2c, b2c = (a.astype(jnp.bfloat16) for a in (w1b, b1b, w2b, b2b))
    out3 = jax.block_until_ready(positionwise_feed_forward(x3, w1c, b1c, w2c, b2c))
    ref3 = _reference(x3.astype(jnp.float32), w1c.astype(jnp.float32),
                      b1c.astype(jnp.float32), w2c.astype(jnp.float32),
                      b2c.astype(jnp.float32), cast_h=jnp.bfloat16)
    assert out3.dtype == jnp.bfloat16
    assert jnp.allclose(out3.astype(jnp.float32), ref3, atol=2e-2, rtol=2e-2), \
        "bf16 mismatch"

    print("KERNEL_OK")
</pallas_src>

<mosaic_0001>
module attributes {stable_mosaic.version = 11 : i64} {
  func.func @_ffn_kernel_noacc(%arg0: i32, %arg1: i32, %arg2: memref<8x128xf32, #tpu.memory_space<vmem>>, %arg3: memref<128x128xf32, #tpu.memory_space<vmem>>, %arg4: memref<1x128xf32, #tpu.memory_space<vmem>>, %arg5: memref<128x128xf32, #tpu.memory_space<vmem>>, %arg6: memref<1x128xf32, #tpu.memory_space<vmem>>, %arg7: memref<8x128xf32, #tpu.memory_space<vmem>>) attributes {dimension_semantics = [#tpu.dimension_semantics<parallel>, #tpu.dimension_semantics<arbitrary>], iteration_bounds = array<i64: 2, 1>, scalar_prefetch = 0 : i64, scratch_operands = 0 : i64, tpu.core_type = #tpu.core_type<tc>, window_params = [{transform_indices = @transform_0, window_bounds = array<i64: 8, 128>}, {transform_indices = @transform_1, window_bounds = array<i64: 128, 128>}, {transform_indices = @transform_2, window_bounds = array<i64: 1, 128>}, {transform_indices = @transform_3, window_bounds = array<i64: 128, 128>}, {pipeline_mode = #tpu.pipeline_mode<synchronous>, transform_indices = @transform_4, window_bounds = array<i64: 1, 128>}, {transform_indices = @transform_5, window_bounds = array<i64: 8, 128>}]} {
    %c0_i32 = arith.constant 0 : i32
    %0 = arith.cmpi eq, %arg1, %c0_i32 : i32
    %1 = arith.extui %0 : i1 to i32
    %c0_i32_0 = arith.constant 0 : i32
    %2 = arith.cmpi ne, %1, %c0_i32_0 : i32
    scf.if %2 {
      %c0_14 = arith.constant 0 : index
      %c0_15 = arith.constant 0 : index
      %16 = vector.load %arg6[%c0_14, %c0_15] : memref<1x128xf32, #tpu.memory_space<vmem>>, vector<1x128xf32>
      %17 = vector.shape_cast %16 : vector<1x128xf32> to vector<1x128xf32>
      %18 = vector.broadcast %17 : vector<1x128xf32> to vector<8x128xf32>
      %c0_16 = arith.constant 0 : index
      %c0_17 = arith.constant 0 : index
      %19 = vector.load %arg7[%c0_16, %c0_17] : memref<8x128xf32, #tpu.memory_space<vmem>>, vector<8x128xf32>
      tpu.vector_store %arg7[%c0_16, %c0_17], %18 {strides = array<i32>} : memref<8x128xf32, #tpu.memory_space<vmem>>, vector<8x128xf32>,
    } else {
    }
    %c0 = arith.constant 0 : index
    %c0_1 = arith.constant 0 : index
    %3 = vector.load %arg2[%c0, %c0_1] : memref<8x128xf32, #tpu.memory_space<vmem>>, vector<8x128xf32>
    %c0_2 = arith.constant 0 : index
    %c0_3 = arith.constant 0 : index
    %4 = vector.load %arg3[%c0_2, %c0_3] : memref<128x128xf32, #tpu.memory_space<vmem>>, vector<128x128xf32>
    %cst = arith.constant dense<0.000000e+00> : vector<8x128xf32>
    %5 = tpu.matmul %3, %4, %cst {dimension_numbers = #tpu.dot_dimension_numbers<[1], [0], [0], [1], [0, 0, 1, 1], [], []>} : vector<8x128xf32>, vector<128x128xf32>, vector<8x128xf32> -> vector<8x128xf32>
    %c0_4 = arith.constant 0 : index
    %c0_5 = arith.constant 0 : index
    %6 = vector.load %arg4[%c0_4, %c0_5] : memref<1x128xf32, #tpu.memory_space<vmem>>, vector<1x128xf32>
    %7 = vector.broadcast %6 : vector<1x128xf32> to vector<8x128xf32>
    %8 = arith.addf %5, %7 : vector<8x128xf32>
    %cst_6 = arith.constant 0.000000e+00 : f32
    %9 = vector.broadcast %cst_6 : f32 to vector<8x128xf32>
    %10 = arith.maximumf %8, %9 : vector<8x128xf32>
    %c0_7 = arith.constant 0 : index
    %c0_8 = arith.constant 0 : index
    %11 = vector.load %arg7[%c0_7, %c0_8] : memref<8x128xf32, #tpu.memory_space<vmem>>, vector<8x128xf32>
    %c0_9 = arith.constant 0 : index
    %c0_10 = arith.constant 0 : index
    %12 = vector.load %arg5[%c0_9, %c0_10] : memref<128x128xf32, #tpu.memory_space<vmem>>, vector<128x128xf32>
    %cst_11 = arith.constant dense<0.000000e+00> : vector<8x128xf32>
    %13 = tpu.matmul %10, %12, %cst_11 {dimension_numbers = #tpu.dot_dimension_numbers<[1], [0], [0], [1], [0, 0, 1, 1], [], []>} : vector<8x128xf32>, vector<128x128xf32>, vector<8x128xf32> -> vector<8x128xf32>
    %14 = arith.addf %11, %13 : vector<8x128xf32>
    %c0_12 = arith.constant 0 : index
    %c0_13 = arith.constant 0 : index
    %15 = vector.load %arg7[%c0_12, %c0_13] : memref<8x128xf32, #tpu.memory_space<vmem>>, vector<8x128xf32>
    tpu.vector_store %arg7[%c0_12, %c0_13], %14 {strides = array<i32>} : memref<8x128xf32, #tpu.memory_space<vmem>>, vector<8x128xf32>,
    return
  }
  func.func @transform_0(%arg0: i32, %arg1: i32) -> (i32, i32) {
    %c0_i32 = arith.constant 0 : i32
    %c0_i32_0 = arith.constant 0 : i32
    return %arg0, %c0_i32 : i32, i32
  }
  func.func @transform_1(%arg0: i32, %arg1: i32) -> (i32, i32) {
    %c0_i32 = arith.constant 0 : i32
    %c0_i32_0 = arith.constant 0 : i32
    return %c0_i32, %arg1 : i32, i32
  }
  func.func @transform_2(%arg0: i32, %arg1: i32) -> (i32, i32) {
    %c0_i32 = arith.constant 0 : i32
    %c0_i32_0 = arith.constant 0 : i32
    return %c0_i32, %arg1 : i32, i32
  }
  func.func @transform_3(%arg0: i32, %arg1: i32) -> (i32, i32) {
    %c0_i32 = arith.constant 0 : i32
    %c0_i32_0 = arith.constant 0 : i32
    return %arg1, %c0_i32 : i32, i32
  }
  func.func @transform_4(%arg0: i32, %arg1: i32) -> (i32, i32) {
    %c0_i32 = arith.constant 0 : i32
    %c0_i32_0 = arith.constant 0 : i32
    %c0_i32_1 = arith.constant 0 : i32
    return %c0_i32, %c0_i32_0 : i32, i32
  }
  func.func @transform_5(%arg0: i32, %arg1: i32) -> (i32, i32) {
    %c0_i32 = arith.constant 0 : i32
    %c0_i32_0 = arith.constant 0 : i32
    return %arg0, %c0_i32 : i32, i32
  }
}

</mosaic_0001>

<llo_original>
// kernel: positionwise_feed_forward.1
$region0: #{positionwise_feed_forward.1}
  #allocation0 [shape = 'u32[]', space=smem, size = 0x4, offset = 0x4, fixed_abs, tag = 'smem constant byte address 0x4 - core index']
  #allocation1 [shape = 'u32[144,128]{1,0:T(1,128)}', space=vmem, size = 0x12000, scoped, tag = 'internal scratch']
  %s0 = inlined_call_operand.vmem [shape: f32[16,128], index: 0, kind: input, shape index: {}]
  %s1 = inlined_call_operand.vmem [shape: f32[128,128], index: 1, kind: input, shape index: {}]
  %s2 = inlined_call_operand.vmem [shape: f32[1,128], index: 2, kind: input, shape index: {}]
  %s3 = inlined_call_operand.vmem [shape: f32[128,128], index: 3, kind: input, shape index: {}]
  %s4 = inlined_call_operand.vmem [shape: f32[1,128], index: 4, kind: input, shape index: {}]
  %s5 = inlined_call_operand.vmem [shape: f32[16,128], index: 5, kind: output, shape index: {}]
  %s6 = sld [smem:[#allocation0]]
  $region57: #{positionwise_feed_forward.1} parent=0
    _
  %s8 = ssub.s32 1, %s6
  %s9 = scalar_select 0, %s8, %s6
  loop: start=0, step=1, limit=4
  $region2: #{positionwise_feed_forward.1} parent=0 // loop_pre_header
    _
  $region3: #{positionwise_feed_forward.1} parent=0 // loop_header
    %s11 = sphi 0, %s15
    %p12 = scmp.ge.s32.totalorder %s11, 4
    %s18 = sphi 0, %s30
    %s19 = sphi 0, %s26
    %s20 = sphi 0, %s18
    %s21 = sphi 0, %s19
    %s22 = sphi 0, %s20
    %s23 = sphi 0, %s21
    %s33 = sphi 0, %s35
    %s36 = sphi 0, %s33
    %s37 = sphi 0, %s36
    %s53 = sphi 0, %s37
    %s59 = sphi 0, %s61
    %s62 = sphi 0, %s59
    %s63 = sphi 0, %s62
    %s79 = sphi 0, %s63
    %s85 = sphi 0, %s87
    %s88 = sphi 0, %s85
    %s89 = sphi 0, %s88
    %s105 = sphi 0, %s89
    %s111 = sphi 0, %s113
    %s114 = sphi 0, %s111
    %s115 = sphi 0, %s114
    %s131 = sphi 0, %s115
    %s135 = sphi 0, %s135
    %s137 = sphi 0, %s135
    %s138 = sphi 0, %s137
    %s152 = sphi 0, %s138
    %s158 = sphi 0, %s160
    %s161 = sphi 0, %s158
    %s162 = sphi 0, %s161
    %s178 = sphi 0, %s162
  $region4: #{positionwise_feed_forward.1} parent=0 // loop_header_branch
    %14 = sbr.rel (%p12) target = $region8
  $region5: #{positionwise_feed_forward.1} parent=0 // loop_body
    %s16 = ssub.s32 %s11, 1
    %s17 = ssub.s32 %s11, 2
    %s24 = sadd.s32 1, %s19
    %p25 = scmp.ge.s32.totalorder %s24, 1
    %s26 = scalar_select %p25, 0, %s24
    %s27 = sadd.s32 1, %s18
    %s28 = scalar_select %p25, %s27, %s18
    %p29 = scmp.ge.s32.totalorder %s28, 2
    %s30 = scalar_select %p29, 0, %s28
    %s31 = ssub.s32 %s18, %s30
    %p32 = scmp.eq.s32.totalorder %s31, 0
    %s34 = sadd.s32 %s33, 1
    %s35 = scalar_select %p32, %s33, %s34
    %p38 = pneg %p32
    %p39 = scmp.eq.s32.totalorder %s11, 1
    %p40 = por %p38, %p39
    %p41 = scmp.ne.s32.totalorder %s33, %s36
    %p42 = scmp.eq.s32.totalorder %s11, 0
    %p43 = por %p41, %p42
    %p44 = scmp.ne.s32.totalorder %s33, %s36
    %p45 = scmp.eq.s32.totalorder %s16, 1
    %p46 = por %p44, %p45
    %p47 = scmp.ne.s32.totalorder %s36, %s37
    %p48 = scmp.eq.s32.totalorder %s16, 0
    %p49 = por %p47, %p48
    %p50 = scmp.ne.s32.totalorder %s36, %s37
    %p51 = scmp.eq.s32.totalorder %s17, 1
    %p52 = por %p50, %p51
    %p54 = scmp.ne.s32.totalorder %s37, %s53
    %p55 = scmp.eq.s32.totalorder %s17, 0
    %p56 = por %p54, %p55
    %s57 = ssub.s32 %s19, %s26
    %p58 = scmp.eq.s32.totalorder %s57, 0
    %s60 = sadd.s32 %s59, 1
    %s61 = scalar_select %p58, %s59, %s60
    %p64 = pneg %p58
    %p65 = scmp.eq.s32.totalorder %s11, 1
    %p66 = por %p64, %p65
    %p67 = scmp.ne.s32.totalorder %s59, %s62
    %p68 = scmp.eq.s32.totalorder %s11, 0
    %p69 = por %p67, %p68
    %p70 = scmp.ne.s32.totalorder %s59, %s62
    %p71 = scmp.eq.s32.totalorder %s16, 1
    %p72 = por %p70, %p71
    %p73 = scmp.ne.s32.totalorder %s62, %s63
    %p74 = scmp.eq.s32.totalorder %s16, 0
    %p75 = por %p73, %p74
    %p76 = scmp.ne.s32.totalorder %s62, %s63
    %p77 = scmp.eq.s32.totalorder %s17, 1
    %p78 = por %p76, %p77
    %p80 = scmp.ne.s32.totalorder %s63, %s79
    %p81 = scmp.eq.s32.totalorder %s17, 0
    %p82 = por %p80, %p81
    %s83 = ssub.s32 %s19, %s26
    %p84 = scmp.eq.s32.totalorder %s83, 0
    %s86 = sadd.s32 %s85, 1
    %s87 = scalar_select %p84, %s85, %s86
    %p90 = pneg %p84
    %p91 = scmp.eq.s32.totalorder %s11, 1
    %p92 = por %p90, %p91
    %p93 = scmp.ne.s32.totalorder %s85, %s88
    %p94 = scmp.eq.s32.totalorder %s11, 0
    %p95 = por %p93, %p94
    %p96 = scmp.ne.s32.totalorder %s85, %s88
    %p97 = scmp.eq.s32.totalorder %s16, 1
    %p98 = por %p96, %p97
    %p99 = scmp.ne.s32.totalorder %s88, %s89
    %p100 = scmp.eq.s32.totalorder %s16, 0
    %p101 = por %p99, %p100
    %p102 = scmp.ne.s32.totalorder %s88, %s89
    %p103 = scmp.eq.s32.totalorder %s17, 1
    %p104 = por %p102, %p103
    %p106 = scmp.ne.s32.totalorder %s89, %s105
    %p107 = scmp.eq.s32.totalorder %s17, 0
    %p108 = por %p106, %p107
    %s109 = ssub.s32 %s19, %s26
    %p110 = scmp.eq.s32.totalorder %s109, 0
    %s112 = sadd.s32 %s111, 1
    %s113 = scalar_select %p110, %s111, %s112
    %p116 = pneg %p110
    %p117 = scmp.eq.s32.totalorder %s11, 1
    %p118 = por %p116, %p117
    %p119 = scmp.ne.s32.totalorder %s111, %s114
    %p120 = scmp.eq.s32.totalorder %s11, 0
    %p121 = por %p119, %p120
    %p122 = scmp.ne.s32.totalorder %s111, %s114
    %p123 = scmp.eq.s32.totalorder %s16, 1
    %p124 = por %p122, %p123
    %p125 = scmp.ne.s32.totalorder %s114, %s115
    %p126 = scmp.eq.s32.totalorder %s16, 0
    %p127 = por %p125, %p126
    %p128 = scmp.ne.s32.totalorder %s114, %s115
    %p129 = scmp.eq.s32.totalorder %s17, 1
    %p130 = por %p128, %p129
    %p132 = scmp.ne.s32.totalorder %s115, %s131
    %p133 = scmp.eq.s32.totalorder %s17, 0
    %p134 = por %p132, %p133
    %s136 = sadd.s32 %s135, 1
    %p139 = scmp.eq.s32.totalorder %s11, 1
    %p140 = scmp.ne.s32.totalorder %s135, %s137
    %p141 = scmp.eq.s32.totalorder %s11, 0
    %p142 = por %p140, %p141
    %p143 = scmp.ne.s32.totalorder %s135, %s137
    %p144 = scmp.eq.s32.totalorder %s16, 1
    %p145 = por %p143, %p144
    %p146 = scmp.ne.s32.totalorder %s137, %s138
    %p147 = scmp.eq.s32.totalorder %s16, 0
    %p148 = por %p146, %p147
    %p149 = scmp.ne.s32.totalorder %s137, %s138
    %p150 = scmp.eq.s32.totalorder %s17, 1
    %p151 = por %p149, %p150
    %p153 = scmp.ne.s32.totalorder %s138, %s152
    %p154 = scmp.eq.s32.totalorder %s17, 0
    %p155 = por %p153, %p154
    %s156 = ssub.s32 %s18, %s30
    %p157 = scmp.eq.s32.totalorder %s156, 0
    %s159 = sadd.s32 %s158, 1
    %s160 = scalar_select %p157, %s158, %s159
    %p163 = pneg %p157
    %p164 = scmp.eq.s32.totalorder %s11, 1
    %p165 = por %p163, %p164
    %p166 = scmp.ne.s32.totalorder %s158, %s161
    %p167 = scmp.eq.s32.totalorder %s11, 0
    %p168 = por %p166, %p167
    %p169 = scmp.ne.s32.totalorder %s158, %s161
    %p170 = scmp.eq.s32.totalorder %s16, 1
    %p171 = por %p169, %p170
    %p172 = scmp.ne.s32.totalorder %s161, %s162
    %p173 = scmp.eq.s32.totalorder %s16, 0
    %p174 = por %p172, %p173
    %p175 = scmp.ne.s32.totalorder %s161, %s162
    %p176 = scmp.eq.s32.totalorder %s17, 1
    %p177 = por %p175, %p176
    %p179 = scmp.ne.s32.totalorder %s162, %s178
    %p180 = scmp.eq.s32.totalorder %s17, 0
    %p181 = por %p179, %p180
    %p182 = scmp.le.s32.totalorder 1, %s11
    %p183 = scmp.lt.s32.totalorder %s11, 3
    %p184 = pnand %p182, %p183
    %p185 = pneg %p184
    // Predicated region
    $region9: #{positionwise_feed_forward.1} parent=5 // pred_check
      _
    $region10: #{positionwise_feed_forward.1} parent=5 // pred_check_branch
      %187 = sbr.rel (%p184) target = $region12
    $region11: #{positionwise_feed_forward.1} parent=5 // pred_region
      %s188 = ssub.s32 %s11, 1
      // Predicated region
      $region13: #{positionwise_feed_forward.1} parent=11 // pred_check
        %p189 = pneg %p75
      $region14: #{positionwise_feed_forward.1} parent=11 // pred_check_branch
        %191 = sbr.rel (%p189) target = $region16
      $region15: #{positionwise_feed_forward.1} parent=11 // pred_region
        %p192 = scmp.lt.s32.totalorder %s21, 0
        %s193 = scalar_select %p192, %s21, 0
        %s194 = smul.addr %s193, 8
        %s195 = scalar_lea.vmem %s1, %s194
      $region16: #{positionwise_feed_forward.1} parent=11 // pred_fallthru
        _
      // Predicated region
      $region17: #{positionwise_feed_forward.1} parent=11 // pred_check
        %p196 = pneg %p101
      $region18: #{positionwise_feed_forward.1} parent=11 // pred_check_branch
        %198 = sbr.rel (%p196) target = $region20
      $region19: #{positionwise_feed_forward.1} parent=11 // pred_region
        %p199 = scmp.lt.s32.totalorder %s21, 0
        %s200 = scalar_select %p199, %s21, 0
        %s201 = scalar_lea.vmem %s2, %s200
      $region20: #{positionwise_feed_forward.1} parent=11 // pred_fallthru
        _
      // Predicated region
      $region21: #{positionwise_feed_forward.1} parent=11 // pred_check
        %p202 = pneg %p127
      $region22: #{positionwise_feed_forward.1} parent=11 // pred_check_branch
        %204 = sbr.rel (%p202) target = $region24
      $region23: #{positionwise_feed_forward.1} parent=11 // pred_region
        %s205 = smul.u32 16, %s21
        %p206 = scmp.lt.s32.totalorder %s205, 15
        %s207 = scalar_select %p206, %s205, 15
        %s208 = smul.addr %s207, 8
        %s209 = scalar_lea.vmem %s3, %s208
        %s210 = smul.u32 16, %s21
      $region24: #{positionwise_feed_forward.1} parent=11 // pred_fallthru
        _
      // Predicated region
      $region25: #{positionwise_feed_forward.1} parent=11 // pred_check
        %p211 = pneg %p148
      $region26: #{positionwise_feed_forward.1} parent=11 // pred_check_branch
        %213 = sbr.rel (%p211) target = $region28
      $region27: #{positionwise_feed_forward.1} parent=11 // pred_region
        _
      $region28: #{positionwise_feed_forward.1} parent=11 // pred_fallthru
        _
    $region12: #{positionwise_feed_forward.1} parent=5 // pred_fallthru
      _
    %p214 = scmp.lt.s32.totalorder %s11, 2
    // Predicated region
    $region29: #{positionwise_feed_forward.1} parent=5 // pred_check
      %p215 = pneg %p214
    $region30: #{positionwise_feed_forward.1} parent=5 // pred_check_branch
      %217 = sbr.rel (%p215) target = $region32
    $region31: #{positionwise_feed_forward.1} parent=5 // pred_region
      // Predicated region
      $region33: #{positionwise_feed_forward.1} parent=31 // pred_check
        %p218 = pneg %p43
      $region34: #{positionwise_feed_forward.1} parent=31 // pred_check_branch
        %220 = sbr.rel (%p218) target = $region36
      $region35: #{positionwise_feed_forward.1} parent=31 // pred_region
        %p221 = scmp.lt.s32.totalorder %s18, 1
        %s222 = scalar_select %p221, %s18, 1
        %s223 = smul.addr %s222, 8
        %s224 = scalar_lea.vmem %s0, %s223
      $region36: #{positionwise_feed_forward.1} parent=31 // pred_fallthru
        _
    $region32: #{positionwise_feed_forward.1} parent=5 // pred_fallthru
      _
    %p225 = scmp.le.s32.totalorder 1, %s11
    %p226 = scmp.lt.s32.totalorder %s11, 3
    %p227 = pnand %p225, %p226
    %p228 = pneg %p227
    // Predicated region
    $region37: #{positionwise_feed_forward.1} parent=5 // pred_check
      _
    $region38: #{positionwise_feed_forward.1} parent=5 // pred_check_branch
      %230 = sbr.rel (%p227) target = $region40
    $region39: #{positionwise_feed_forward.1} parent=5 // pred_region
      %s231 = ssub.s32 %s11, 1
      %p232 = scmp.lt.s32.totalorder %s20, 1
      %s233 = scalar_select %p232, %s20, 1
      %s234 = smul.addr %s233, 8
      %s235 = scalar_lea.vmem %s0, %s234
      %p236 = pneg %p49
      %p237 = pneg %p46
      %p238 = scmp.lt.s32.totalorder %s21, 0
      %s239 = scalar_select %p238, %s21, 0
      %s240 = smul.addr %s239, 8
      %s241 = scalar_lea.vmem %s1, %s240
      %p242 = pneg %p75
      %p243 = pneg %p72
      %p244 = scmp.lt.s32.totalorder %s21, 0
      %s245 = scalar_select %p244, %s21, 0
      %s246 = scalar_lea.vmem %s2, %s245
      %p247 = pneg %p101
      %p248 = pneg %p98
      %s249 = smul.u32 16, %s21
      %p250 = scmp.lt.s32.totalorder %s249, 15
      %s251 = scalar_select %p250, %s249, 15
      %s252 = smul.addr %s251, 8
      %s253 = scalar_lea.vmem %s3, %s252
      %p254 = pneg %p127
      %p255 = pneg %p124
      %p256 = pneg %p148
      %p257 = pneg %p145
      %p258 = pneg %p174
      %p259 = pneg %p171
      %p260 = scmp.lt.s32.totalorder %s20, 1
      %s261 = scalar_select %p260, %s20, 1
      %s262 = smul.addr %s261, 8
      %s263 = scalar_lea.vmem %s5, %s262
      %p264 = scmp.lt.s32.totalorder %s20, 1
      %s265 = scalar_select %p264, %s20, 1
      %s266 = smul.addr %s265, 8
      %s267 = scalar_lea.vmem %s0, %s266
      %p268 = scmp.lt.s32.totalorder %s21, 0
      %s269 = scalar_select %p268, %s21, 0
      %s270 = smul.addr %s269, 8
      %s271 = scalar_lea.vmem %s1, %s270
      %p272 = scmp.lt.s32.totalorder %s21, 0
      %s273 = scalar_select %p272, %s21, 0
      %s274 = scalar_lea.vmem %s2, %s273
      %s275 = smul.u32 16, %s21
      %p276 = scmp.lt.s32.totalorder %s275, 15
      %s277 = scalar_select %p276, %s275, 15
      %s278 = smul.addr %s277, 8
      %s279 = scalar_lea.vmem %s3, %s278
      %s280 = smul.u32 16, %s21
      %p281 = scmp.lt.s32.totalorder %s20, 1
      %s282 = scalar_select %p281, %s20, 1
      %s283 = smul.addr %s282, 8
      %s284 = scalar_lea.vmem %s5, %s283
      %p285 = scmp.eq.s32.totalorder %s21, 0
      // Predicated region
      $region41: #{positionwise_feed_forward.1} parent=39 // pred_check
        %p286 = pneg %p285
      $region42: #{positionwise_feed_forward.1} parent=39 // pred_check_branch
        %288 = sbr.rel (%p286) target = $region44
      $region43: #{positionwise_feed_forward.1} parent=39 // pred_region
        %v289 = vld [vmem:[%s4] sm:$0x1]
        %v291 = vlaneseq
        %v292 = vshrl.u32 %v291, 7
        %v293 = vsub.s32 0, %v292
        %v294 = vrot.slane %v289, %v293
        %296 = vst [vmem:[%s284] sm:$0xff] %v294
      $region44: #{positionwise_feed_forward.1} parent=39 // pred_fallthru
        _
      %v297 = vld [vmem:[%s267] sm:$0xff]
      %v298 = vld [vmem:[%s271] sm:$0xff]
      %v299 = vld [vmem:[%s271 + $0x8] sm:$0xff]
      %v300 = vld [vmem:[%s271 + $0x10] sm:$0xff]
      %v301 = vld [vmem:[%s271 + $0x18] sm:$0xff]
      %v302 = vld [vmem:[%s271 + $0x20] sm:$0xff]
      %v303 = vld [vmem:[%s271 + $0x28] sm:$0xff]
      %v304 = vld [vmem:[%s271 + $0x30] sm:$0xff]
      %v305 = vld [vmem:[%s271 + $0x38] sm:$0xff]
      %v306 = vld [vmem:[%s271 + $0x40] sm:$0xff]
      %v307 = vld [vmem:[%s271 + $0x48] sm:$0xff]
      %v308 = vld [vmem:[%s271 + $0x50] sm:$0xff]
      %v309 = vld [vmem:[%s271 + $0x58] sm:$0xff]
      %v310 = vld [vmem:[%s271 + $0x60] sm:$0xff]
      %v311 = vld [vmem:[%s271 + $0x68] sm:$0xff]
      %v312 = vld [vmem:[%s271 + $0x70] sm:$0xff]
      %v313 = vld [vmem:[%s271 + $0x78] sm:$0xff]
      %v314 = vld [vmem:[%s274] sm:$0x1]
      %v316 = vlaneseq
      %v317 = vshrl.u32 %v316, 7
      %v318 = vsub.s32 0, %v317
      %v319 = vrot.slane %v314, %v318
      %321 = vmatprep.subr.mxu0 0.0
      %322 = vmatpush1.msra.mxu0 %v298
      %323 = vmatprep.subr.mxu0 0.0
      %324 = vmatpush1.msra.mxu0 %v299
      %325 = vmatprep.subr.mxu0 0.0
      %326 = vmatpush1.msra.mxu0 %v300
      %327 = vmatprep.subr.mxu0 0.0
      %328 = vmatpush1.msra.mxu0 %v301
      %329 = vmatprep.subr.mxu0 0.0
      %330 = vmatpush1.msra.mxu0 %v302
      %331 = vmatprep.subr.mxu0 0.0
      %332 = vmatpush1.msra.mxu0 %v303
      %333 = vmatprep.subr.mxu0 0.0
      %334 = vmatpush1.msra.mxu0 %v304
      %335 = vmatprep.subr.mxu0 0.0
      %336 = vmatpush1.msra.mxu0 %v305
      %337 = vmatprep.subr.mxu0 0.0
      %338 = vmatpush1.msra.mxu0 %v306
      %339 = vmatprep.subr.mxu0 0.0
      %340 = vmatpush1.msra.mxu0 %v307
      %341 = vmatprep.subr.mxu0 0.0
      %342 = vmatpush1.msra.mxu0 %v308
      %343 = vmatprep.subr.mxu0 0.0
      %344 = vmatpush1.msra.mxu0 %v309
      %345 = vmatprep.subr.mxu0 0.0
      %346 = vmatpush1.msra.mxu0 %v310
      %347 = vmatprep.subr.mxu0 0.0
      %348 = vmatpush1.msra.mxu0 %v311
      %349 = vmatprep.subr.mxu0 0.0
      %350 = vmatpush1.msra.mxu0 %v312
      %351 = vmatprep.subr.mxu0 0.0
      %352 = vmatpush1.msra.mxu0 %v313
      %353 = vmatprep.subr.mxu0 0.0
      %354 = vmatpush1.msra.mxu0 0.0
      %355 = vmatprep.subr.mxu0 0.0
      %356 = vmatpush1.msra.mxu0 0.0
      %357 = vmatprep.subr.mxu0 0.0
      %358 = vmatpush1.msra.mxu0 0.0
      %359 = vmatprep.subr.mxu0 0.0
      %360 = vmatpush1.msra.mxu0 0.0
      %361 = vmatprep.subr.mxu0 0.0
      %362 = vmatpush1.msra.mxu0 0.0
      %363 = vmatprep.subr.mxu0 0.0
      %364 = vmatpush1.msra.mxu0 0.0
      %365 = vmatprep.subr.mxu0 0.0
      %366 = vmatpush1.msra.mxu0 0.0
      %367 = vmatprep.subr.mxu0 0.0
      %368 = vmatpush1.msra.mxu0 0.0
      %369 = vmatprep.subr.mxu0 0.0
      %370 = vmatpush1.msra.mxu0 0.0
      %371 = vmatprep.subr.mxu0 0.0
      %372 = vmatpush1.msra.mxu0 0.0
      %373 = vmatprep.subr.mxu0 0.0
      %374 = vmatpush1.msra.mxu0 0.0
      %375 = vmatprep.subr.mxu0 0.0
      %376 = vmatpush1.msra.mxu0 0.0
      %377 = vmatprep.subr.mxu0 0.0
      %378 = vmatpush1.msra.mxu0 0.0
      %379 = vmatprep.subr.mxu0 0.0
      %380 = vmatpush1.msra.mxu0 0.0
      %381 = vmatprep.subr.mxu0 0.0
      %382 = vmatpush1.msra.mxu0 0.0
      %383 = vmatprep.subr.mxu0 0.0
      %384 = vmatpush1.msra.mxu0 0.0
      %385 = vmatprep.mubr.f32.mxu0 0.0
      %386 = vmatmul.mubr.f32.gmra.mrb[0].mxu0 %v297
      %v387 = vpop.f32.mrb[0].mxu0
      %v388 = vadd.f32 %v319, %v387
      %v389 = vpop.f32.mrb[0].mxu0
      %390 = vdwg.mxu0
      %v391 = vmax.f32 %v388, 0.0
      %v392 = vld [vmem:[%s284] sm:$0xff]
      %v393 = vld [vmem:[%s279] sm:$0xff]
      %v394 = vld [vmem:[%s279 + $0x8] sm:$0xff]
      %v395 = vld [vmem:[%s279 + $0x10] sm:$0xff]
      %v396 = vld [vmem:[%s279 + $0x18] sm:$0xff]
      %v397 = vld [vmem:[%s279 + $0x20] sm:$0xff]
      %v398 = vld [vmem:[%s279 + $0x28] sm:$0xff]
      %v399 = vld [vmem:[%s279 + $0x30] sm:$0xff]
      %v400 = vld [vmem:[%s279 + $0x38] sm:$0xff]
      %v401 = vld [vmem:[%s279 + $0x40] sm:$0xff]
      %v402 = vld [vmem:[%s279 + $0x48] sm:$0xff]
      %v403 = vld [vmem:[%s279 + $0x50] sm:$0xff]
      %v404 = vld [vmem:[%s279 + $0x58] sm:$0xff]
      %v405 = vld [vmem:[%s279 + $0x60] sm:$0xff]
      %v406 = vld [vmem:[%s279 + $0x68] sm:$0xff]
      %v407 = vld [vmem:[%s279 + $0x70] sm:$0xff]
      %v408 = vld [vmem:[%s279 + $0x78] sm:$0xff]
      %409 = vmatprep.subr.mxu0 0.0
      %410 = vmatpush1.msra.mxu0 %v393
      %411 = vmatprep.subr.mxu0 0.0
      %412 = vmatpush1.msra.mxu0 %v394
      %413 = vmatprep.subr.mxu0 0.0
      %414 = vmatpush1.msra.mxu0 %v395
      %415 = vmatprep.subr.mxu0 0.0
      %416 = vmatpush1.msra.mxu0 %v396
      %417 = vmatprep.subr.mxu0 0.0
      %418 = vmatpush1.msra.mxu0 %v397
      %419 = vmatprep.subr.mxu0 0.0
      %420 = vmatpush1.msra.mxu0 %v398
      %421 = vmatprep.subr.mxu0 0.0
      %422 = vmatpush1.msra.mxu0 %v399
      %423 = vmatprep.subr.mxu0 0.0
      %424 = vmatpush1.msra.mxu0 %v400
      %425 = vmatprep.subr.mxu0 0.0
      %426 = vmatpush1.msra.mxu0 %v401
      %427 = vmatprep.subr.mxu0 0.0
      %428 = vmatpush1.msra.mxu0 %v402
      %429 = vmatprep.subr.mxu0 0.0
      %430 = vmatpush1.msra.mxu0 %v403
      %431 = vmatprep.subr.mxu0 0.0
      %432 = vmatpush1.msra.mxu0 %v404
      %433 = vmatprep.subr.mxu0 0.0
      %434 = vmatpush1.msra.mxu0 %v405
      %435 = vmatprep.subr.mxu0 0.0
      %436 = vmatpush1.msra.mxu0 %v406
      %437 = vmatprep.subr.mxu0 0.0
      %438 = vmatpush1.msra.mxu0 %v407
      %439 = vmatprep.subr.mxu0 0.0
      %440 = vmatpush1.msra.mxu0 %v408
      %441 = vmatprep.subr.mxu0 0.0
      %442 = vmatpush1.msra.mxu0 0.0
      %443 = vmatprep.subr.mxu0 0.0
      %444 = vmatpush1.msra.mxu0 0.0
      %445 = vmatprep.subr.mxu0 0.0
      %446 = vmatpush1.msra.mxu0 0.0
      %447 = vmatprep.subr.mxu0 0.0
      %448 = vmatpush1.msra.mxu0 0.0
      %449 = vmatprep.subr.mxu0 0.0
      %450 = vmatpush1.msra.mxu0 0.0
      %451 = vmatprep.subr.mxu0 0.0
      %452 = vmatpush1.msra.mxu0 0.0
      %453 = vmatprep.subr.mxu0 0.0
      %454 = vmatpush1.msra.mxu0 0.0
      %455 = vmatprep.subr.mxu0 0.0
      %456 = vmatpush1.msra.mxu0 0.0
      %457 = vmatprep.subr.mxu0 0.0
      %458 = vmatpush1.msra.mxu0 0.0
      %459 = vmatprep.subr.mxu0 0.0
      %460 = vmatpush1.msra.mxu0 0.0
      %461 = vmatprep.subr.mxu0 0.0
      %462 = vmatpush1.msra.mxu0 0.0
      %463 = vmatprep.subr.mxu0 0.0
      %464 = vmatpush1.msra.mxu0 0.0
      %465 = vmatprep.subr.mxu0 0.0
      %466 = vmatpush1.msra.mxu0 0.0
      %467 = vmatprep.subr.mxu0 0.0
      %468 = vmatpush1.msra.mxu0 0.0
      %469 = vmatprep.subr.mxu0 0.0
      %470 = vmatpush1.msra.mxu0 0.0
      %471 = vmatprep.subr.mxu0 0.0
      %472 = vmatpush1.msra.mxu0 0.0
      %473 = vmatprep.mubr.f32.mxu0 0.0
      %474 = vmatmul.mubr.f32.gmra.mrb[0].mxu0 %v391
      %v475 = vpop.f32.mrb[0].mxu0
      %v476 = vadd.f32 0.0, %v475
      %v477 = vpop.f32.mrb[0].mxu0
      %478 = vdwg.mxu0
      %v479 = vadd.f32 %v392, %v476
      %480 = vst [vmem:[%s284] sm:$0xff] %v479
      %p481 = scmp.lt.s32.totalorder %s20, 1
      %s482 = scalar_select %p481, %s20, 1
      %s483 = smul.addr %s482, 8
      %s484 = scalar_lea.vmem %s5, %s483
      // Predicated region
      $region45: #{positionwise_feed_forward.1} parent=39 // pred_check
        %p485 = pneg %p171
      $region46: #{positionwise_feed_forward.1} parent=39 // pred_check_branch
        %487 = sbr.rel (%p485) target = $region48
      $region47: #{positionwise_feed_forward.1} parent=39 // pred_region
        _
      $region48: #{positionwise_feed_forward.1} parent=39 // pred_fallthru
        _
    $region40: #{positionwise_feed_forward.1} parent=5 // pred_fallthru
      _
    %p488 = scmp.le.s32.totalorder 2, %s11
    // Predicated region
    $region49: #{positionwise_feed_forward.1} parent=5 // pred_check
      %p489 = pneg %p488
    $region50: #{positionwise_feed_forward.1} parent=5 // pred_check_branch
      %491 = sbr.rel (%p489) target = $region52
    $region51: #{positionwise_feed_forward.1} parent=5 // pred_region
      %s492 = ssub.s32 %s11, 2
      // Predicated region
      $region53: #{positionwise_feed_forward.1} parent=51 // pred_check
        %p493 = pneg %p177
      $region54: #{positionwise_feed_forward.1} parent=51 // pred_check_branch
        %495 = sbr.rel (%p493) target = $region56
      $region55: #{positionwise_feed_forward.1} parent=51 // pred_region
        %p496 = scmp.lt.s32.totalorder %s22, 1
        %s497 = scalar_select %p496, %s22, 1
        %s498 = smul.addr %s497, 8
        %s499 = scalar_lea.vmem %s5, %s498
      $region56: #{positionwise_feed_forward.1} parent=51 // pred_fallthru
        _
    $region52: #{positionwise_feed_forward.1} parent=5 // pred_fallthru
      _
  $region6: #{positionwise_feed_forward.1} parent=0 // loop_footer
    %s15 = sadd.s32 1, %s11
  $region7: #{positionwise_feed_forward.1} parent=0 // loop_footer_branch
    %10 = sbr.rel target = $region3
  $region8: #{positionwise_feed_forward.1} parent=0 // loop_exit
    _

</llo_original>
